<compile_context>
chip_gen: v7x
topology: tpu7x:2x2x1
jax: 0.10.0
libtpu: 0.0.40
codegen_flags: <defaults>
</compile_context>

<pallas_src>
import functools

import jax
import jax.numpy as jnp
from jax import lax
from jax.experimental import pallas as pl
from jax.experimental.pallas import tpu as pltpu

LANE = 128
SUBLANE = 8
MAX_BLOCK_ROWS = 8192                      # up to (8192, 128) f32 tiles per step
VMEM_INPUT_BUDGET = 24 * 1024 * 1024       # double-buffered input tiles budget
VMEM_LIMIT_BYTES = 32 * 1024 * 1024        # explicit scoped-VMEM limit (safe on v5e/v6e/v7x)
DEFAULT_NUM_SPLITS = 2                     # leading "parallel" axis (2 TCs on v7x)


def _round_up(a, b):
    return -(-a // b) * b


def _cdiv(a, b):
    return -(-a // b)


def _focal_elementwise(x, t, *, alpha, gamma):
    """Pure-JAX elementwise sigmoid focal loss (torchvision formula)."""
    x = x.astype(jnp.float32)
    t = t.astype(jnp.float32)
    p = jax.nn.sigmoid(x)
    ce = jnp.maximum(x, 0.0) - x * t + jnp.log1p(jnp.exp(-jnp.abs(x)))
    p_t = p * t + (1.0 - p) * (1.0 - t)
    loss = ce * (1.0 - p_t) ** gamma
    if alpha >= 0:
        alpha_t = alpha * t + (1.0 - alpha) * (1.0 - t)
        loss = alpha_t * loss
    return loss


def _focal_loss_kernel(x_ref, t_ref, o_ref, acc_ref, *, alpha, gamma,
                       rows, block_rows, inner_steps, num_blocks, has_oob):
    """Streaming focal-loss reduction.

    x_ref, t_ref : (block_rows, LANE) logits / targets tile (any float dtype)
    o_ref        : (SUBLANE, LANE) per-split partial sums (f32)
    acc_ref      : (SUBLANE, LANE) f32 VMEM accumulator (persists across steps)
    """
    c = pl.program_id(0)   # parallel split (one TensorCore each on v7x)
    i = pl.program_id(1)   # streaming step within the split
    blk = c * inner_steps + i

    @pl.when(i == 0)
    def _():
        acc_ref[...] = jnp.zeros_like(acc_ref)

    x = x_ref[...].astype(jnp.float32)
    t = t_ref[...].astype(jnp.float32)

    # One exp + one log1p per element.  Stable BCE-with-logits:
    #   ce = max(x, 0) - x*t + log1p(exp(-|x|))
    # and sigmoid derived from the same exp:
    #   p = 1/(1+e) if x >= 0 else e/(1+e),  e = exp(-|x|)
    e = jnp.exp(-jnp.abs(x))
    ce = jnp.maximum(x, 0.0) - x * t + jnp.log1p(e)
    r = pl.reciprocal(1.0 + e)                 # EUP slot (exact)
    p = jnp.where(x >= 0.0, r, e * r)

    # 1 - p_t = p + t - 2*p*t  (holds for soft targets too)
    one_minus_pt = p + t * (1.0 - 2.0 * p)
    if float(gamma) == float(int(gamma)) and int(gamma) >= 0:
        mod = lax.integer_pow(one_minus_pt, int(gamma))   # VPU multiply chain
    else:
        mod = one_minus_pt ** gamma
    loss = ce * mod

    if alpha >= 0:
        # alpha*t + (1-alpha)*(1-t) == (1-alpha) + (2*alpha-1)*t
        loss = loss * ((2.0 * alpha - 1.0) * t + (1.0 - alpha))

    def accumulate(v):
        # Fold the (block_rows,128) tile down to one vreg-high accumulator:
        # aligned sublane-group reshape -> pure VPU adds, tiny scratch traffic.
        acc_ref[...] += jnp.sum(v.reshape(-1, SUBLANE, LANE), axis=0)

    last_valid = num_blocks - 1
    valid_rows_last = rows - last_valid * block_rows       # static int
    has_partial = valid_rows_last != block_rows            # static bool

    if has_partial:
        # Only the single partial block pays the mask.
        @pl.when(blk == last_valid)
        def _():
            row = lax.broadcasted_iota(jnp.int32, (block_rows, LANE), 0)
            accumulate(jnp.where(row < valid_rows_last, loss, 0.0))

        if num_blocks > 1:
            @pl.when(blk < last_valid)
            def _():
                accumulate(loss)
    elif has_oob:
        # Grid padded for split balance: skip steps past the last valid block.
        @pl.when(blk <= last_valid)
        def _():
            accumulate(loss)
    else:
        accumulate(loss)

    @pl.when(i == inner_steps - 1)
    def _():
        o_ref[...] = acc_ref[...]   # full (8,128) vreg store; wrapper reduces


def focal_loss(inputs, targets, *, alpha=0.3, gamma=3, reduction="mean",
               num_splits=DEFAULT_NUM_SPLITS):
    """Pallas implementation of sigmoid focal loss ('mean' | 'sum' | 'none')."""
    assert inputs.shape == targets.shape

    if reduction == "none":
        # TODO(synk): dedicated elementwise Pallas path for reduction='none';
        # pure-JAX fallback keeps torchvision parity.
        return _focal_elementwise(inputs, targets, alpha=alpha, gamma=gamma
                                  ).astype(inputs.dtype)
    assert reduction in ("mean", "sum")

    total_n = int(inputs.size)
    assert total_n > 0

    x_flat = inputs.reshape(-1)
    t_flat = targets.reshape(-1)

    if total_n < SUBLANE * LANE:
        # Too small to be worth a kernel launch.
        total = jnp.sum(_focal_elementwise(x_flat, t_flat, alpha=alpha, gamma=gamma))
    else:
        rows, rem = divmod(total_n, LANE)

        # Sub-lane ragged tail (<128 elems): negligible pure-JAX side sum, so
        # the bulk reaches the kernel without any full-tensor pad/copy pass.
        tail = jnp.float32(0.0)
        if rem:
            tail = jnp.sum(_focal_elementwise(
                x_flat[rows * LANE:], t_flat[rows * LANE:],
                alpha=alpha, gamma=gamma))

        # Lane-dense (rows, 128) views; dtypes kept as supplied (upcast in-kernel).
        x2d = x_flat[: rows * LANE].reshape(rows, LANE)
        t2d = t_flat[: rows * LANE].reshape(rows, LANE)

        itemsz = x2d.dtype.itemsize + t2d.dtype.itemsize
        rows_cap = max(SUBLANE,
                       (VMEM_INPUT_BUDGET // (2 * LANE * itemsz)) // SUBLANE * SUBLANE)
        block_rows = min(MAX_BLOCK_ROWS, rows_cap,
                         max(SUBLANE, (rows // SUBLANE) * SUBLANE))
        num_blocks = _cdiv(rows, block_rows)
        nsplit = num_splits if (num_splits > 1 and num_blocks >= num_splits) else 1
        inner_steps = _cdiv(num_blocks, nsplit)
        has_oob = nsplit * inner_steps > num_blocks   # padded grid steps

        if has_oob:
            def in_map(c, i):
                # Clamp so padded steps re-read the last valid block (their
                # contribution is skipped in-kernel).
                return (jnp.minimum(c * inner_steps + i, num_blocks - 1), 0)
        else:
            def in_map(c, i):
                return (c * inner_steps + i, 0)

        kernel = functools.partial(
            _focal_loss_kernel,
            alpha=float(alpha), gamma=gamma, rows=rows, block_rows=block_rows,
            inner_steps=inner_steps, num_blocks=num_blocks, has_oob=has_oob)

        partials = pl.pallas_call(
            kernel,
            out_shape=jax.ShapeDtypeStruct((nsplit * SUBLANE, LANE), jnp.float32),
            grid=(nsplit, inner_steps),
            in_specs=[pl.BlockSpec((block_rows, LANE), in_map),
                      pl.BlockSpec((block_rows, LANE), in_map)],
            out_specs=pl.BlockSpec((SUBLANE, LANE), lambda c, i: (c, 0)),
            scratch_shapes=[pltpu.VMEM((SUBLANE, LANE), jnp.float32)],
            compiler_params=pltpu.CompilerParams(
                dimension_semantics=("parallel", "arbitrary"),
                vmem_limit_bytes=VMEM_LIMIT_BYTES),
        )(x2d, t2d)

        # Final cross-lane / cross-split reduction: tiny, done in the wrapper.
        total = jnp.sum(partials) + tail

    if reduction == "mean":
        return total / jnp.float32(total_n)
    return total


if __name__ == "__main__":
    key = jax.random.PRNGKey(0)
    k1, k2, k3, k4 = jax.random.split(key, 4)

    # Small NCHW-like shape: batch=2, channels=4, spatial=16x16.
    shape = (2, 4, 16, 16)
    inputs = jax.random.normal(k1, shape, dtype=jnp.float32) * 2.0     # logits
    targets = jax.random.bernoulli(k2, p=0.3, shape=shape).astype(jnp.float32)

    # FocalLoss(alpha=0.3, gamma=3, reduction='mean')
    loss = focal_loss(inputs, targets, alpha=0.3, gamma=3, reduction="mean")
    loss = jax.block_until_ready(loss)
    ref = jnp.mean(_focal_elementwise(inputs, targets, alpha=0.3, gamma=3))
    assert jnp.allclose(loss, ref, rtol=1e-5, atol=1e-6), (loss, ref)

    # Ragged shape: exercises the partial-last-block mask and the sub-lane tail.
    shape2 = (3, 5, 7, 11)                                            # 1155 elems
    x2 = jax.random.normal(k3, shape2, dtype=jnp.float32) * 1.5
    t2 = jax.random.bernoulli(k4, p=0.5, shape=shape2).astype(jnp.float32)
    loss2 = jax.block_until_ready(
        focal_loss(x2, t2, alpha=0.3, gamma=3, reduction="sum"))
    ref2 = jnp.sum(_focal_elementwise(x2, t2, alpha=0.3, gamma=3))
    assert jnp.allclose(loss2, ref2, rtol=1e-5, atol=1e-5), (loss2, ref2)

    print("KERNEL_OK")
</pallas_src>

<mosaic_0001>
module attributes {stable_mosaic.version = 11 : i64} {
  func.func @_focal_loss_kernel(%arg0: i32, %arg1: i32, %arg2: memref<16x128xf32, #tpu.memory_space<vmem>>, %arg3: memref<16x128xf32, #tpu.memory_space<vmem>>, %arg4: memref<8x128xf32, #tpu.memory_space<vmem>>, %arg5: memref<8x128xf32, #tpu.memory_space<vmem>>) attributes {dimension_semantics = [#tpu.dimension_semantics<parallel>, #tpu.dimension_semantics<arbitrary>], iteration_bounds = array<i64: 1, 1>, scalar_prefetch = 0 : i64, scratch_operands = 1 : i64, tpu.core_type = #tpu.core_type<tc>, window_params = [{transform_indices = @transform_0, window_bounds = array<i64: 16, 128>}, {transform_indices = @transform_1, window_bounds = array<i64: 16, 128>}, {transform_indices = @transform_2, window_bounds = array<i64: 8, 128>}]} {
    %c0_i32 = arith.constant 0 : i32
    %0 = arith.cmpi eq, %arg1, %c0_i32 : i32
    %1 = arith.extui %0 : i1 to i32
    %c0_i32_0 = arith.constant 0 : i32
    %2 = arith.cmpi ne, %1, %c0_i32_0 : i32
    scf.if %2 {
      %cst_18 = arith.constant 0.000000e+00 : f32
      %44 = vector.broadcast %cst_18 : f32 to vector<8x128xf32>
      %c0_19 = arith.constant 0 : index
      %c0_20 = arith.constant 0 : index
      %45 = vector.load %arg5[%c0_19, %c0_20] : memref<8x128xf32, #tpu.memory_space<vmem>>, vector<8x128xf32>
      tpu.vector_store %arg5[%c0_19, %c0_20], %44 {strides = array<i32>} : memref<8x128xf32, #tpu.memory_space<vmem>>, vector<8x128xf32>,
    } else {
    }
    %c0 = arith.constant 0 : index
    %c0_1 = arith.constant 0 : index
    %3 = vector.load %arg2[%c0, %c0_1] : memref<16x128xf32, #tpu.memory_space<vmem>>, vector<16x128xf32>
    %c0_2 = arith.constant 0 : index
    %c0_3 = arith.constant 0 : index
    %4 = vector.load %arg3[%c0_2, %c0_3] : memref<16x128xf32, #tpu.memory_space<vmem>>, vector<16x128xf32>
    %5 = math.absf %3 : vector<16x128xf32>
    %cst = arith.constant 0.000000e+00 : f32
    %6 = vector.broadcast %cst : f32 to vector<16x128xf32>
    %7 = arith.subf %6, %5 : vector<16x128xf32>
    %8 = math.exp %7 : vector<16x128xf32>
    %cst_4 = arith.constant 0.000000e+00 : f32
    %9 = vector.broadcast %cst_4 : f32 to vector<16x128xf32>
    %10 = arith.maximumf %3, %9 : vector<16x128xf32>
    %11 = arith.mulf %3, %4 : vector<16x128xf32>
    %12 = arith.subf %10, %11 : vector<16x128xf32>
    %13 = math.log1p %8 : vector<16x128xf32>
    %14 = arith.addf %12, %13 : vector<16x128xf32>
    %cst_5 = arith.constant 1.000000e+00 : f32
    %15 = vector.broadcast %cst_5 : f32 to vector<16x128xf32>
    %16 = arith.addf %15, %8 : vector<16x128xf32>
    %17 = tpu.reciprocal %16 : vector<16x128xf32> -> vector<16x128xf32>
    %cst_6 = arith.constant 0.000000e+00 : f32
    %18 = vector.broadcast %cst_6 : f32 to vector<16x128xf32>
    %19 = arith.cmpf oge, %3, %18 : vector<16x128xf32>
    %20 = arith.mulf %8, %17 : vector<16x128xf32>
    %21 = arith.select %19, %17, %20 : vector<16x128xi1>, vector<16x128xf32>
    %cst_7 = arith.constant 2.000000e+00 : f32
    %22 = vector.broadcast %cst_7 : f32 to vector<16x128xf32>
    %23 = arith.mulf %22, %21 : vector<16x128xf32>
    %cst_8 = arith.constant 1.000000e+00 : f32
    %24 = vector.broadcast %cst_8 : f32 to vector<16x128xf32>
    %25 = arith.subf %24, %23 : vector<16x128xf32>
    %26 = arith.mulf %4, %25 : vector<16x128xf32>
    %27 = arith.addf %21, %26 : vector<16x128xf32>
    %28 = arith.mulf %27, %27 : vector<16x128xf32>
    %29 = arith.mulf %27, %28 : vector<16x128xf32>
    %30 = arith.mulf %14, %29 : vector<16x128xf32>
    %cst_9 = arith.constant -4.000000e-01 : f32
    %31 = vector.broadcast %cst_9 : f32 to vector<16x128xf32>
    %32 = arith.mulf %31, %4 : vector<16x128xf32>
    %cst_10 = arith.constant 0.699999988 : f32
    %33 = vector.broadcast %cst_10 : f32 to vector<16x128xf32>
    %34 = arith.addf %32, %33 : vector<16x128xf32>
    %35 = arith.mulf %30, %34 : vector<16x128xf32>
    %c0_11 = arith.constant 0 : index
    %c0_12 = arith.constant 0 : index
    %36 = vector.load %arg5[%c0_11, %c0_12] : memref<8x128xf32, #tpu.memory_space<vmem>>, vector<8x128xf32>
    %37 = vector.shape_cast %35 : vector<16x128xf32> to vector<2x8x128xf32>
    %cst_13 = arith.constant dense<0.000000e+00> : vector<8x128xf32>
    %38 = vector.multi_reduction <add>, %37, %cst_13 [0] : vector<2x8x128xf32> to vector<8x128xf32>
    %39 = arith.addf %36, %38 : vector<8x128xf32>
    %c0_14 = arith.constant 0 : index
    %c0_15 = arith.constant 0 : index
    %40 = vector.load %arg5[%c0_14, %c0_15] : memref<8x128xf32, #tpu.memory_space<vmem>>, vector<8x128xf32>
    tpu.vector_store %arg5[%c0_14, %c0_15], %39 {strides = array<i32>} : memref<8x128xf32, #tpu.memory_space<vmem>>, vector<8x128xf32>,
    %c0_i32_16 = arith.constant 0 : i32
    %41 = arith.cmpi eq, %arg1, %c0_i32_16 : i32
    %42 = arith.extui %41 : i1 to i32
    %c0_i32_17 = arith.constant 0 : i32
    %43 = arith.cmpi ne, %42, %c0_i32_17 : i32
    scf.if %43 {
      %c0_18 = arith.constant 0 : index
      %c0_19 = arith.constant 0 : index
      %44 = vector.load %arg5[%c0_18, %c0_19] : memref<8x128xf32, #tpu.memory_space<vmem>>, vector<8x128xf32>
      %c0_20 = arith.constant 0 : index
      %c0_21 = arith.constant 0 : index
      %45 = vector.load %arg4[%c0_20, %c0_21] : memref<8x128xf32, #tpu.memory_space<vmem>>, vector<8x128xf32>
      tpu.vector_store %arg4[%c0_20, %c0_21], %44 {strides = array<i32>} : memref<8x128xf32, #tpu.memory_space<vmem>>, vector<8x128xf32>,
    } else {
    }
    return
  }
  func.func @transform_0(%arg0: i32, %arg1: i32) -> (i32, i32) {
    %c1_i32 = arith.constant 1 : i32
    %0 = arith.muli %arg0, %c1_i32 : i32
    %1 = arith.addi %0, %arg1 : i32
    %c0_i32 = arith.constant 0 : i32
    %c0_i32_0 = arith.constant 0 : i32
    return %1, %c0_i32 : i32, i32
  }
  func.func @transform_1(%arg0: i32, %arg1: i32) -> (i32, i32) {
    %c1_i32 = arith.constant 1 : i32
    %0 = arith.muli %arg0, %c1_i32 : i32
    %1 = arith.addi %0, %arg1 : i32
    %c0_i32 = arith.constant 0 : i32
    %c0_i32_0 = arith.constant 0 : i32
    return %1, %c0_i32 : i32, i32
  }
  func.func @transform_2(%arg0: i32, %arg1: i32) -> (i32, i32) {
    %c0_i32 = arith.constant 0 : i32
    %c0_i32_0 = arith.constant 0 : i32
    return %arg0, %c0_i32 : i32, i32
  }
}

</mosaic_0001>

<llo_original>
// kernel: tpu_custom_call.1
$region0: #{tpu_custom_call.1}
  #allocation0 [shape = 'u32[]', space=smem, size = 0x4, offset = 0x4, fixed_abs, tag = 'smem constant byte address 0x4 - core index']
  #allocation1 [shape = 'u32[144,128]{1,0:T(1,128)}', space=vmem, size = 0x12000, scoped, tag = 'internal scratch']
  #allocation2 [shape = 'f32[8,128]{1,0:T(8,128)}', space=vmem, size = 0x1000, scoped, tag = 'scratch operand']
  %s0 = inlined_call_operand.hbm [shape: f32[16,128], index: 0, kind: input, shape index: {}]
  %s1 = inlined_call_operand.hbm [shape: f32[16,128], index: 1, kind: input, shape index: {}]
  %s2 = inlined_call_operand.hbm [shape: f32[8,128], index: 2, kind: output, shape index: {}]
  %s3 = sld [smem:[#allocation0]]
  $region34: #{tpu_custom_call.1} parent=0
    _
  %s5 = ssub.s32 1, %s3
  %s6 = scalar_select 0, %s5, %s3
  $region1: #{tpu_custom_call.1} parent=0
    #allocation3 [shape = 'u8[8192]{0}', space=vmem, size = 0x2000, scoped, tag = 'input window, operand 0, single buffered']
    #allocation4 [shape = 's32[1]{0}', space=sflag, size = 0x4, scoped, tag = 'scoped memory for tpu_custom_call.1']
    #allocation5 [shape = 's32[1]{0}', space=sflag, size = 0x4, scoped, tag = 'scoped memory for tpu_custom_call.1']
    #allocation6 [shape = 'u8[8192]{0}', space=vmem, size = 0x2000, scoped, tag = 'input window, operand 1, single buffered']
    #allocation7 [shape = 's32[1]{0}', space=sflag, size = 0x4, scoped, tag = 'scoped memory for tpu_custom_call.1']
    #allocation8 [shape = 'u8[4096]{0}', space=vmem, size = 0x1000, scoped, tag = 'output window, operand 0, single buffered']
    %7 = vsyncpa [#allocation4], 0
    %8 = vsyncpa [#allocation7], 0
    %9 = vsyncpa [#allocation5], 0
    // Predicated region
    $region2: #{tpu_custom_call.1} parent=1 // pred_check
      _
    $region3: #{tpu_custom_call.1} parent=1 // pred_check_branch
      %11 = sbr.rel (0) target = $region5
    $region4: #{tpu_custom_call.1} parent=1 // pred_region
      %s12 = sadd.s32 0, 0
      %s13 = smul.u32 2, %s12
      %s15 = ssub.s32 256, 256
      %16 = vsyncadd [#allocation4], %s15
      %s17 = smul.addr %s13, 128
      %s18 = scalar_lea.hbm %s0, %s17
      %s19 = sshll.u32 [#allocation3], 4
      %s20 = int_to_ptr.vmem [resolvable:$true] %s19
      %25 = dma.hbm_to_vmem [thread:$0]  %s18, 256, %s20, [#allocation4], 128, 128, 8
    $region5: #{tpu_custom_call.1} parent=1 // pred_fallthru
      _
    // Predicated region
    $region6: #{tpu_custom_call.1} parent=1 // pred_check
      _
    $region7: #{tpu_custom_call.1} parent=1 // pred_check_branch
      %27 = sbr.rel (0) target = $region9
    $region8: #{tpu_custom_call.1} parent=1 // pred_region
      %s28 = sadd.s32 0, 0
      %s29 = smul.u32 2, %s28
      %s31 = ssub.s32 256, 256
      %32 = vsyncadd [#allocation7], %s31
      %s33 = smul.addr %s29, 128
      %s34 = scalar_lea.hbm %s1, %s33
      %s35 = sshll.u32 [#allocation6], 4
      %s36 = int_to_ptr.vmem [resolvable:$true] %s35
      %41 = dma.hbm_to_vmem [thread:$0]  %s34, 256, %s36, [#allocation7], 128, 128, 8
    $region9: #{tpu_custom_call.1} parent=1 // pred_fallthru
      _
    // Predicated region
    $region10: #{tpu_custom_call.1} parent=1 // pred_check
      _
    $region11: #{tpu_custom_call.1} parent=1 // pred_check_branch
      %43 = sbr.rel (0) target = $region13
    $region12: #{tpu_custom_call.1} parent=1 // pred_region
      %44 = dma.done [#allocation4], 256
    $region13: #{tpu_custom_call.1} parent=1 // pred_fallthru
      _
    // Predicated region
    $region14: #{tpu_custom_call.1} parent=1 // pred_check
      _
    $region15: #{tpu_custom_call.1} parent=1 // pred_check_branch
      %46 = sbr.rel (0) target = $region17
    $region16: #{tpu_custom_call.1} parent=1 // pred_region
      %47 = dma.done [#allocation7], 256
    $region17: #{tpu_custom_call.1} parent=1 // pred_fallthru
      _
    %s48 = sadd.s32 0, 0
    %s49 = smul.u32 2, %s48
    %s50 = sadd.s32 0, 0
    %s51 = smul.u32 2, %s50
    %p52 = scmp.eq.s32.totalorder 0, 0
    // Predicated region
    $region18: #{tpu_custom_call.1} parent=1 // pred_check
      %p53 = pneg %p52
    $region19: #{tpu_custom_call.1} parent=1 // pred_check_branch
      %55 = sbr.rel (%p53) target = $region21
    $region20: #{tpu_custom_call.1} parent=1 // pred_region
      %56 = vst [vmem:[#allocation2] sm:$0xff] 0.0
    $region21: #{tpu_custom_call.1} parent=1 // pred_fallthru
      _
    %v57 = vld [vmem:[#allocation3] sm:$0xff]
    %v58 = vld [vmem:[#allocation3 + $0x8] sm:$0xff]
    %v59 = vld [vmem:[#allocation6] sm:$0xff]
    %v60 = vld [vmem:[#allocation6 + $0x8] sm:$0xff]
    %v61 = vand.u32 2147483647, %v57
    %v62 = vand.u32 2147483647, %v58
    %v63 = vsub.f32 0.0, %v61
    %v64 = vsub.f32 0.0, %v62
    %v65 = vmul.f32 %v63, 1.442695
    %v66 = vpow.pop %v65
    %v67 = vmul.f32 %v64, 1.442695
    %v68 = vpow.pop %v67
    %v69 = vmax.f32 %v57, 0.0
    %v70 = vmax.f32 %v58, 0.0
    %v71 = vmul.f32 %v57, %v59
    %v72 = vmul.f32 %v58, %v60
    %v73 = vsub.f32 %v69, %v71
    %v74 = vsub.f32 %v70, %v72
    %v75 = vadd.f32 %v66, 1.0
    %v76 = vlog2.pop %v75
    %v77 = vmul.f32 %v76, 0.6931472
    %v78 = vmul.f32 -0.5, %v66
    %v79 = vadd.f32 %v78, 1.0
    %v80 = vmul.f32 %v79, %v66
    %v81 = vand.u32 2147483647, %v66
    %vm82 = vcmp.lt.f32.partialorder %v81, 0.0004427343
    %v83 = vsel %vm82, %v80, %v77
    %v84 = vadd.f32 %v68, 1.0
    %v85 = vlog2.pop %v84
    %v86 = vmul.f32 %v85, 0.6931472
    %v87 = vmul.f32 -0.5, %v68
    %v88 = vadd.f32 %v87, 1.0
    %v89 = vmul.f32 %v88, %v68
    %v90 = vand.u32 2147483647, %v68
    %vm91 = vcmp.lt.f32.partialorder %v90, 0.0004427343
    %v92 = vsel %vm91, %v89, %v86
    %v93 = vadd.f32 %v73, %v83
    %v94 = vadd.f32 %v74, %v92
    %v95 = vadd.f32 %v66, 1.0
    %v96 = vadd.f32 %v68, 1.0
    %v97 = vrcp.pop %v95
    %v98 = vrcp.pop %v96
    %vm99 = vcmp.ge.f32.partialorder %v57, 0.0
    %vm100 = vcmp.ge.f32.partialorder %v58, 0.0
    %v101 = vmul.f32 %v66, %v97
    %v102 = vmul.f32 %v68, %v98
    %v103 = vsel %vm99, %v97, %v101
    %v104 = vsel %vm100, %v98, %v102
    %v105 = vmul.f32 %v103, 2.0
    %v106 = vmul.f32 %v104, 2.0
    %v107 = vsub.f32 1.0, %v105
    %v108 = vsub.f32 1.0, %v106
    %v109 = vmul.f32 %v59, %v107
    %v110 = vmul.f32 %v60, %v108
    %v111 = vadd.f32 %v103, %v109
    %v112 = vadd.f32 %v104, %v110
    %v113 = vmul.f32 %v111, %v111
    %v114 = vmul.f32 %v112, %v112
    %v115 = vmul.f32 %v111, %v113
    %v116 = vmul.f32 %v112, %v114
    %v117 = vmul.f32 %v93, %v115
    %v118 = vmul.f32 %v94, %v116
    %v119 = vmul.f32 %v59, -0.4
    %v120 = vmul.f32 %v60, -0.4
    %v121 = vadd.f32 %v119, 0.7
    %v122 = vadd.f32 %v120, 0.7
    %v123 = vmul.f32 %v117, %v121
    %v124 = vmul.f32 %v118, %v122
    %v125 = vld [vmem:[#allocation2] sm:$0xff]
    %v126 = vadd.f32 %v123, %v124
    %v127 = vadd.f32 %v125, %v126
    %128 = vst [vmem:[#allocation2] sm:$0xff] %v127
    // Predicated region
    $region22: #{tpu_custom_call.1} parent=1 // pred_check
      %p129 = pneg %p52
    $region23: #{tpu_custom_call.1} parent=1 // pred_check_branch
      %131 = sbr.rel (%p129) target = $region25
    $region24: #{tpu_custom_call.1} parent=1 // pred_region
      %v132 = vld [vmem:[#allocation2] sm:$0xff]
      %133 = vst [vmem:[#allocation8] sm:$0xff] %v132
    $region25: #{tpu_custom_call.1} parent=1 // pred_fallthru
      _
    // Predicated region
    $region26: #{tpu_custom_call.1} parent=1 // pred_check
      _
    $region27: #{tpu_custom_call.1} parent=1 // pred_check_branch
      %135 = sbr.rel (0) target = $region29
    $region28: #{tpu_custom_call.1} parent=1 // pred_region
      %s137 = ssub.s32 128, 128
      %138 = vsyncadd [#allocation5], %s137
      %s140 = sshll.u32 [#allocation8], 4
      %s141 = int_to_ptr.vmem [resolvable:$true] %s140
      %143 = dma.vmem_to_hbm [thread:$0]  %s141, 128, %s2, [#allocation5]
    $region29: #{tpu_custom_call.1} parent=1 // pred_fallthru
      _
    // Predicated region
    $region30: #{tpu_custom_call.1} parent=1 // pred_check
      _
    $region31: #{tpu_custom_call.1} parent=1 // pred_check_branch
      %145 = sbr.rel (0) target = $region33
    $region32: #{tpu_custom_call.1} parent=1 // pred_region
      %146 = dma.done [#allocation5], 128
    $region33: #{tpu_custom_call.1} parent=1 // pred_fallthru
      _
    %147 = vsyncpa [#allocation4], 1
    %148 = vsyncpa [#allocation7], 1
    %149 = vsyncpa [#allocation5], 1

</llo_original>
